<compile_context>
chip_gen: v5e
topology: v5e:2x2
jax: 0.10.0
libtpu: 0.0.40
codegen_flags: <defaults>
</compile_context>

<pallas_src>
import functools

import jax
import jax.numpy as jnp
import numpy as np
from jax.experimental import pallas as pl
from jax.experimental.pallas import tpu as pltpu


# ---------------------------------------------------------------------------
# Pallas kernels
# ---------------------------------------------------------------------------
def _conv_stats_kernel(x_ref, w_ref, y_ref, psum_ref, psq_ref, *, kh, w_out, tile_m):
    """Direct 3x3 conv on one (image, M-tile) + fused BN partial statistics.

    x_ref    : (1, Hp*W, KW*Cin)  bf16   width-unrolled, reflect-padded image
    w_ref    : (KH, Cout, KW*Cin) bf16   one (Cout, KW*Cin) weight slab per row tap
    y_ref    : (1, Cout, TM)      f32    conv output tile (lane-dense: TM on lanes)
    psum_ref : (1, Cout, 1)       f32    per-tile sum over the TM axis
    psq_ref  : (1, Cout, 1)       f32    per-tile sum of squares over the TM axis
    """
    j = pl.program_id(1)
    base = pl.multiple_of(j * tile_m, tile_m)
    dims = (((1,), (1,)), ((), ()))      # contract KW*Cin of both operands -> (Cout, TM)

    acc = None
    for dy in range(kh):                 # KH accumulated MXU matmuls (no im2col)
        xs = x_ref[0, pl.ds(base + dy * w_out, tile_m), :]         # (TM, KW*Cin) bf16
        part = jax.lax.dot_general(w_ref[dy], xs, dims,
                                   preferred_element_type=jnp.float32)
        acc = part if acc is None else acc + part                  # (Cout, TM) f32

    y_ref[0] = acc
    psum_ref[0] = jnp.sum(acc, axis=1, keepdims=True)              # (Cout, 1)
    psq_ref[0] = jnp.sum(acc * acc, axis=1, keepdims=True)         # (Cout, 1)


def _bn_lrelu_kernel(x_ref, scale_ref, shift_ref, o_ref):
    """y = x * scale[c] + shift[c]; LeakyReLU(0.1) on lane-dense (Cout, TM) tiles."""
    y = x_ref[0] * scale_ref[...] + shift_ref[...]
    o_ref[0] = jnp.where(y >= 0, y, 0.1 * y)


# ---------------------------------------------------------------------------
# Wrapper
# ---------------------------------------------------------------------------
def _pick_tile_m(hw):
    """Largest tile that divides H*W and is either == H*W or a multiple of 128."""
    if hw <= 2048:
        return hw
    for tm in (2048, 1024, 512, 384, 256, 128):
        if hw % tm == 0:
            return tm
    return hw   # fallback: whole image (always a legal block)


def conv2d_forward(x_nchw, weight_oihw, gamma, beta, *, eps=1e-5):
    """Forward of the derain `Conv2d` block (module defaults: kernel=3, stride=1,
    reflect padding, no bias, BatchNorm2d with batch statistics, LeakyReLU(0.1))."""
    # TODO(synk): only the module defaults are implemented (stride=1, padding_type
    # 'reflect', use_bias=False); other constructor configurations are not covered.
    n, cin, h, w = x_nchw.shape
    cout, _, kh, kw = weight_oihw.shape
    p = kh // 2
    hp = h + 2 * p
    kwc = kw * cin
    hw = h * w

    # --- wrapper-side layout prep (one cheap XLA pass over the small input) ------
    x = jnp.transpose(x_nchw, (0, 2, 3, 1)).astype(jnp.float32)            # NHWC
    xp = jnp.pad(x, ((0, 0), (p, p), (p, p), (0, 0)), mode="reflect")      # (n,hp,wp,cin)
    # Width-tap unroll (KW x, not 9x im2col): xw[n, r, x, dx*cin+ci] = xp[n, r, x+dx, ci].
    # After flattening (r, x) the row-tap shift dy becomes a plain +dy*W row offset,
    # so the kernel only needs 2D slices + 2D matmuls (robust Mosaic lowering).
    xw = jnp.concatenate([xp[:, :, dx:dx + w, :] for dx in range(kw)], axis=-1)
    xw = xw.astype(jnp.bfloat16).reshape(n, hp * w, kwc)                   # bf16 inputs
    # Weights: w_t[dy, co, dx*cin+ci] = weight[co, ci, dy, dx]
    w_t = jnp.transpose(weight_oihw, (2, 0, 3, 1)).reshape(kh, cout, kwc)
    w_t = w_t.astype(jnp.bfloat16)

    tm = _pick_tile_m(hw)
    nj = hw // tm
    g = n * nj

    # --- conv + fused BN partial statistics --------------------------------------
    # The whole padded image stays resident in VMEM per grid step (a few KiB at these
    # channel counts, well under the 16 MiB v5e scoped budget); for very large images
    # switch the input to a manual halo DMA (pl.ANY + make_async_copy).
    kern = functools.partial(_conv_stats_kernel, kh=kh, w_out=w, tile_m=tm)
    conv, psum, psq = pl.pallas_call(
        kern,
        grid=(n, nj),
        in_specs=[
            pl.BlockSpec((1, hp * w, kwc), lambda ni, ji: (ni, 0, 0)),
            pl.BlockSpec((kh, cout, kwc), lambda ni, ji: (0, 0, 0)),
        ],
        out_specs=(
            pl.BlockSpec((1, cout, tm), lambda ni, ji: (ni, 0, ji)),          # NCHW
            pl.BlockSpec((1, cout, 1), lambda ni, ji: (ni * nj + ji, 0, 0)),
            pl.BlockSpec((1, cout, 1), lambda ni, ji: (ni * nj + ji, 0, 0)),
        ),
        out_shape=(
            jax.ShapeDtypeStruct((n, cout, hw), jnp.float32),
            jax.ShapeDtypeStruct((g, cout, 1), jnp.float32),
            jax.ShapeDtypeStruct((g, cout, 1), jnp.float32),
        ),
        compiler_params=pltpu.CompilerParams(
            dimension_semantics=("parallel", "parallel")),
    )(xw, w_t)

    # --- tiny finalize of BatchNorm batch statistics (biased variance) -----------
    cnt = jnp.float32(n * hw)
    mean = jnp.sum(psum[:, :, 0], axis=0) / cnt                            # (cout,)
    ex2 = jnp.sum(psq[:, :, 0], axis=0) / cnt
    var = jnp.maximum(ex2 - mean * mean, 0.0)
    scale = gamma.astype(jnp.float32) / jnp.sqrt(var + eps)
    shift = beta.astype(jnp.float32) - mean * scale

    # --- fused BatchNorm affine + LeakyReLU, in place over the conv buffer -------
    out = pl.pallas_call(
        _bn_lrelu_kernel,
        grid=(n, nj),
        in_specs=[
            pl.BlockSpec((1, cout, tm), lambda ni, ji: (ni, 0, ji)),
            pl.BlockSpec((cout, 1), lambda ni, ji: (0, 0)),
            pl.BlockSpec((cout, 1), lambda ni, ji: (0, 0)),
        ],
        out_specs=pl.BlockSpec((1, cout, tm), lambda ni, ji: (ni, 0, ji)),
        out_shape=jax.ShapeDtypeStruct((n, cout, hw), jnp.float32),
        input_output_aliases={0: 0},
        compiler_params=pltpu.CompilerParams(
            dimension_semantics=("parallel", "parallel")),
    )(conv, scale.reshape(cout, 1), shift.reshape(cout, 1))

    return out.reshape(n, cout, h, w)    # already NCHW -- no output transpose pass


# ---------------------------------------------------------------------------
# Pure-JAX reference (correctness check only)
# ---------------------------------------------------------------------------
def conv2d_reference(x_nchw, weight_oihw, gamma, beta, eps=1e-5):
    """Reference using the same bf16 input quantization as the kernel; f32 math."""
    x = jnp.transpose(x_nchw, (0, 2, 3, 1)).astype(jnp.float32)
    k = weight_oihw.shape[2]
    p = k // 2
    xp = jnp.pad(x, ((0, 0), (p, p), (p, p), (0, 0)), mode="reflect")
    xp = xp.astype(jnp.bfloat16).astype(jnp.float32)
    w_hwio = jnp.transpose(weight_oihw, (2, 3, 1, 0))
    w_hwio = w_hwio.astype(jnp.bfloat16).astype(jnp.float32)
    conv = jax.lax.conv_general_dilated(
        xp, w_hwio, window_strides=(1, 1), padding="VALID",
        dimension_numbers=("NHWC", "HWIO", "NHWC"))
    mean = jnp.mean(conv, axis=(0, 1, 2))
    var = jnp.mean(jnp.square(conv - mean), axis=(0, 1, 2))
    y = (conv - mean) / jnp.sqrt(var + eps) * gamma + beta
    y = jnp.where(y >= 0, y, 0.1 * y)
    return jnp.transpose(y, (0, 3, 1, 2))


if __name__ == "__main__":
    key = jax.random.PRNGKey(0)
    kx, kp = jax.random.split(key)

    # Small shapes consistent with the module: Conv2d(in_channels=4, out_channels=8)
    N, CIN, COUT, H, W, K = 2, 4, 8, 16, 16, 3
    x = jax.random.normal(kx, (N, CIN, H, W), jnp.float32)

    # Synthetic deterministic parameters: conv weight ~ N(0, 1/fan_in),
    # BatchNorm gamma=1, beta=0 (PyTorch defaults), no conv bias (use_bias=False).
    fan_in = CIN * K * K
    weight = jax.random.normal(kp, (COUT, CIN, K, K), jnp.float32) / jnp.sqrt(float(fan_in))
    gamma = jnp.ones((COUT,), jnp.float32)
    beta = jnp.zeros((COUT,), jnp.float32)

    fwd = jax.jit(conv2d_forward)
    out = jax.block_until_ready(fwd(x, weight, gamma, beta))
    ref = jax.block_until_ready(conv2d_reference(x, weight, gamma, beta))

    assert out.shape == (N, COUT, H, W), out.shape
    np.testing.assert_allclose(np.asarray(out), np.asarray(ref), rtol=2e-3, atol=2e-3)
    print("KERNEL_OK")
</pallas_src>

<mosaic_0001>
module attributes {stable_mosaic.version = 11 : i64} {
  func.func @_conv_stats_kernel(%arg0: i32, %arg1: i32, %arg2: memref<1x288x12xbf16, #tpu.memory_space<vmem>>, %arg3: memref<3x8x12xbf16, #tpu.memory_space<vmem>>, %arg4: memref<1x8x256xf32, #tpu.memory_space<vmem>>, %arg5: memref<1x8x1xf32, #tpu.memory_space<vmem>>, %arg6: memref<1x8x1xf32, #tpu.memory_space<vmem>>) attributes {dimension_semantics = [#tpu.dimension_semantics<parallel>, #tpu.dimension_semantics<parallel>], iteration_bounds = array<i64: 2, 1>, scalar_prefetch = 0 : i64, scratch_operands = 0 : i64, tpu.core_type = #tpu.core_type<tc>, window_params = [{transform_indices = @transform_0, window_bounds = array<i64: 1, 288, 12>}, {pipeline_mode = #tpu.pipeline_mode<synchronous>, transform_indices = @transform_1, window_bounds = array<i64: 3, 8, 12>}, {transform_indices = @transform_2, window_bounds = array<i64: 1, 8, 256>}, {transform_indices = @transform_3, window_bounds = array<i64: 1, 8, 1>}, {transform_indices = @transform_4, window_bounds = array<i64: 1, 8, 1>}]} {
    %c256_i32 = arith.constant 256 : i32
    %0 = arith.muli %arg1, %c256_i32 : i32
    %1 = tpu.assume_multiple %0, 256 : i32
    %c0_i32 = arith.constant 0 : i32
    %2 = arith.addi %1, %c0_i32 : i32
    %c0 = arith.constant 0 : index
    %3 = arith.index_cast %2 : i32 to index
    %c0_0 = arith.constant 0 : index
    %4 = vector.load %arg2[%c0, %3, %c0_0] : memref<1x288x12xbf16, #tpu.memory_space<vmem>>, vector<1x256x12xbf16>
    %5 = vector.shape_cast %4 : vector<1x256x12xbf16> to vector<256x12xbf16>
    %c0_1 = arith.constant 0 : index
    %c0_2 = arith.constant 0 : index
    %c0_3 = arith.constant 0 : index
    %6 = vector.load %arg3[%c0_1, %c0_2, %c0_3] : memref<3x8x12xbf16, #tpu.memory_space<vmem>>, vector<1x8x12xbf16>
    %7 = vector.shape_cast %6 : vector<1x8x12xbf16> to vector<8x12xbf16>
    %cst = arith.constant dense<0.000000e+00> : vector<8x256xf32>
    %8 = tpu.matmul %7, %5, %cst {dimension_numbers = #tpu.dot_dimension_numbers<[1], [1], [0], [0], [0, 0, 1, 0], [], []>} : vector<8x12xbf16>, vector<256x12xbf16>, vector<8x256xf32> -> vector<8x256xf32>
    %c16_i32 = arith.constant 16 : i32
    %9 = arith.addi %1, %c16_i32 : i32
    %c0_4 = arith.constant 0 : index
    %10 = arith.index_cast %9 : i32 to index
    %c0_5 = arith.constant 0 : index
    %11 = vector.load %arg2[%c0_4, %10, %c0_5] : memref<1x288x12xbf16, #tpu.memory_space<vmem>>, vector<1x256x12xbf16>
    %12 = vector.shape_cast %11 : vector<1x256x12xbf16> to vector<256x12xbf16>
    %c1 = arith.constant 1 : index
    %c0_6 = arith.constant 0 : index
    %c0_7 = arith.constant 0 : index
    %13 = vector.load %arg3[%c1, %c0_6, %c0_7] : memref<3x8x12xbf16, #tpu.memory_space<vmem>>, vector<1x8x12xbf16>
    %14 = vector.shape_cast %13 : vector<1x8x12xbf16> to vector<8x12xbf16>
    %cst_8 = arith.constant dense<0.000000e+00> : vector<8x256xf32>
    %15 = tpu.matmul %14, %12, %cst_8 {dimension_numbers = #tpu.dot_dimension_numbers<[1], [1], [0], [0], [0, 0, 1, 0], [], []>} : vector<8x12xbf16>, vector<256x12xbf16>, vector<8x256xf32> -> vector<8x256xf32>
    %16 = arith.addf %8, %15 : vector<8x256xf32>
    %c32_i32 = arith.constant 32 : i32
    %17 = arith.addi %1, %c32_i32 : i32
    %c0_9 = arith.constant 0 : index
    %18 = arith.index_cast %17 : i32 to index
    %c0_10 = arith.constant 0 : index
    %19 = vector.load %arg2[%c0_9, %18, %c0_10] : memref<1x288x12xbf16, #tpu.memory_space<vmem>>, vector<1x256x12xbf16>
    %20 = vector.shape_cast %19 : vector<1x256x12xbf16> to vector<256x12xbf16>
    %c2 = arith.constant 2 : index
    %c0_11 = arith.constant 0 : index
    %c0_12 = arith.constant 0 : index
    %21 = vector.load %arg3[%c2, %c0_11, %c0_12] : memref<3x8x12xbf16, #tpu.memory_space<vmem>>, vector<1x8x12xbf16>
    %22 = vector.shape_cast %21 : vector<1x8x12xbf16> to vector<8x12xbf16>
    %cst_13 = arith.constant dense<0.000000e+00> : vector<8x256xf32>
    %23 = tpu.matmul %22, %20, %cst_13 {dimension_numbers = #tpu.dot_dimension_numbers<[1], [1], [0], [0], [0, 0, 1, 0], [], []>} : vector<8x12xbf16>, vector<256x12xbf16>, vector<8x256xf32> -> vector<8x256xf32>
    %24 = arith.addf %16, %23 : vector<8x256xf32>
    %c0_14 = arith.constant 0 : index
    %c0_15 = arith.constant 0 : index
    %c0_16 = arith.constant 0 : index
    %25 = vector.load %arg4[%c0_14, %c0_15, %c0_16] : memref<1x8x256xf32, #tpu.memory_space<vmem>>, vector<1x8x256xf32>
    %26 = vector.shape_cast %25 : vector<1x8x256xf32> to vector<8x256xf32>
    %27 = vector.shape_cast %24 : vector<8x256xf32> to vector<1x8x256xf32>
    tpu.vector_store %arg4[%c0_14, %c0_15, %c0_16], %27 {strides = array<i32>} : memref<1x8x256xf32, #tpu.memory_space<vmem>>, vector<1x8x256xf32>,
    %cst_17 = arith.constant dense<0.000000e+00> : vector<8xf32>
    %28 = vector.multi_reduction <add>, %24, %cst_17 [1] : vector<8x256xf32> to vector<8xf32>
    %29 = vector.shape_cast %28 : vector<8xf32> to vector<8x1xf32>
    %c0_18 = arith.constant 0 : index
    %c0_19 = arith.constant 0 : index
    %c0_20 = arith.constant 0 : index
    %30 = vector.load %arg5[%c0_18, %c0_19, %c0_20] : memref<1x8x1xf32, #tpu.memory_space<vmem>>, vector<1x8x1xf32>
    %31 = vector.shape_cast %30 : vector<1x8x1xf32> to vector<8x1xf32>
    %32 = vector.shape_cast %29 : vector<8x1xf32> to vector<1x8x1xf32>
    tpu.vector_store %arg5[%c0_18, %c0_19, %c0_20], %32 {strides = array<i32>} : memref<1x8x1xf32, #tpu.memory_space<vmem>>, vector<1x8x1xf32>,
    %33 = arith.mulf %24, %24 : vector<8x256xf32>
    %cst_21 = arith.constant dense<0.000000e+00> : vector<8xf32>
    %34 = vector.multi_reduction <add>, %33, %cst_21 [1] : vector<8x256xf32> to vector<8xf32>
    %35 = vector.shape_cast %34 : vector<8xf32> to vector<8x1xf32>
    %c0_22 = arith.constant 0 : index
    %c0_23 = arith.constant 0 : index
    %c0_24 = arith.constant 0 : index
    %36 = vector.load %arg6[%c0_22, %c0_23, %c0_24] : memref<1x8x1xf32, #tpu.memory_space<vmem>>, vector<1x8x1xf32>
    %37 = vector.shape_cast %36 : vector<1x8x1xf32> to vector<8x1xf32>
    %38 = vector.shape_cast %35 : vector<8x1xf32> to vector<1x8x1xf32>
    tpu.vector_store %arg6[%c0_22, %c0_23, %c0_24], %38 {strides = array<i32>} : memref<1x8x1xf32, #tpu.memory_space<vmem>>, vector<1x8x1xf32>,
    return
  }
  func.func @transform_0(%arg0: i32, %arg1: i32) -> (i32, i32, i32) {
    %c0_i32 = arith.constant 0 : i32
    %c0_i32_0 = arith.constant 0 : i32
    %c0_i32_1 = arith.constant 0 : i32
    return %arg0, %c0_i32, %c0_i32_0 : i32, i32, i32
  }
  func.func @transform_1(%arg0: i32, %arg1: i32) -> (i32, i32, i32) {
    %c0_i32 = arith.constant 0 : i32
    %c0_i32_0 = arith.constant 0 : i32
    %c0_i32_1 = arith.constant 0 : i32
    %c0_i32_2 = arith.constant 0 : i32
    return %c0_i32, %c0_i32_0, %c0_i32_1 : i32, i32, i32
  }
  func.func @transform_2(%arg0: i32, %arg1: i32) -> (i32, i32, i32) {
    %c0_i32 = arith.constant 0 : i32
    %c0_i32_0 = arith.constant 0 : i32
    return %arg0, %c0_i32, %arg1 : i32, i32, i32
  }
  func.func @transform_3(%arg0: i32, %arg1: i32) -> (i32, i32, i32) {
    %c1_i32 = arith.constant 1 : i32
    %0 = arith.muli %arg0, %c1_i32 : i32
    %1 = arith.addi %0, %arg1 : i32
    %c0_i32 = arith.constant 0 : i32
    %c0_i32_0 = arith.constant 0 : i32
    %c0_i32_1 = arith.constant 0 : i32
    return %1, %c0_i32, %c0_i32_0 : i32, i32, i32
  }
  func.func @transform_4(%arg0: i32, %arg1: i32) -> (i32, i32, i32) {
    %c1_i32 = arith.constant 1 : i32
    %0 = arith.muli %arg0, %c1_i32 : i32
    %1 = arith.addi %0, %arg1 : i32
    %c0_i32 = arith.constant 0 : i32
    %c0_i32_0 = arith.constant 0 : i32
    %c0_i32_1 = arith.constant 0 : i32
    return %1, %c0_i32, %c0_i32_0 : i32, i32, i32
  }
}

module attributes {stable_mosaic.version = 11 : i64} {
  func.func @_bn_lrelu_kernel(%arg0: i32, %arg1: i32, %arg2: memref<1x8x256xf32, #tpu.memory_space<vmem>>, %arg3: memref<8x1xf32, #tpu.memory_space<vmem>>, %arg4: memref<8x1xf32, #tpu.memory_space<vmem>>, %arg5: memref<1x8x256xf32, #tpu.memory_space<vmem>>) attributes {dimension_semantics = [#tpu.dimension_semantics<parallel>, #tpu.dimension_semantics<parallel>], iteration_bounds = array<i64: 2, 1>, scalar_prefetch = 0 : i64, scratch_operands = 0 : i64, tpu.core_type = #tpu.core_type<tc>, window_params = [{transform_indices = @transform_0, window_bounds = array<i64: 1, 8, 256>}, {pipeline_mode = #tpu.pipeline_mode<synchronous>, transform_indices = @transform_1, window_bounds = array<i64: 8, 1>}, {pipeline_mode = #tpu.pipeline_mode<synchronous>, transform_indices = @transform_2, window_bounds = array<i64: 8, 1>}, {transform_indices = @transform_3, window_bounds = array<i64: 1, 8, 256>}]} {
    %c0 = arith.constant 0 : index
    %c0_0 = arith.constant 0 : index
    %c0_1 = arith.constant 0 : index
    %0 = vector.load %arg2[%c0, %c0_0, %c0_1] : memref<1x8x256xf32, #tpu.memory_space<vmem>>, vector<1x8x256xf32>
    %1 = vector.shape_cast %0 : vector<1x8x256xf32> to vector<8x256xf32>
    %c0_2 = arith.constant 0 : index
    %c0_3 = arith.constant 0 : index
    %2 = vector.load %arg3[%c0_2, %c0_3] : memref<8x1xf32, #tpu.memory_space<vmem>>, vector<8x1xf32>
    %3 = vector.broadcast %2 : vector<8x1xf32> to vector<8x256xf32>
    %4 = arith.mulf %1, %3 : vector<8x256xf32>
    %c0_4 = arith.constant 0 : index
    %c0_5 = arith.constant 0 : index
    %5 = vector.load %arg4[%c0_4, %c0_5] : memref<8x1xf32, #tpu.memory_space<vmem>>, vector<8x1xf32>
    %6 = vector.broadcast %5 : vector<8x1xf32> to vector<8x256xf32>
    %7 = arith.addf %4, %6 : vector<8x256xf32>
    %cst = arith.constant 0.000000e+00 : f32
    %8 = vector.broadcast %cst : f32 to vector<8x256xf32>
    %9 = arith.cmpf oge, %7, %8 : vector<8x256xf32>
    %cst_6 = arith.constant 1.000000e-01 : f32
    %10 = vector.broadcast %cst_6 : f32 to vector<8x256xf32>
    %11 = arith.mulf %10, %7 : vector<8x256xf32>
    %12 = arith.select %9, %7, %11 : vector<8x256xi1>, vector<8x256xf32>
    %c0_7 = arith.constant 0 : index
    %c0_8 = arith.constant 0 : index
    %c0_9 = arith.constant 0 : index
    %13 = vector.load %arg5[%c0_7, %c0_8, %c0_9] : memref<1x8x256xf32, #tpu.memory_space<vmem>>, vector<1x8x256xf32>
    %14 = vector.shape_cast %13 : vector<1x8x256xf32> to vector<8x256xf32>
    %15 = vector.shape_cast %12 : vector<8x256xf32> to vector<1x8x256xf32>
    tpu.vector_store %arg5[%c0_7, %c0_8, %c0_9], %15 {strides = array<i32>} : memref<1x8x256xf32, #tpu.memory_space<vmem>>, vector<1x8x256xf32>,
    return
  }
  func.func @transform_0(%arg0: i32, %arg1: i32) -> (i32, i32, i32) {
    %c0_i32 = arith.constant 0 : i32
    %c0_i32_0 = arith.constant 0 : i32
    return %arg0, %c0_i32, %arg1 : i32, i32, i32
  }
  func.func @transform_1(%arg0: i32, %arg1: i32) -> (i32, i32) {
    %c0_i32 = arith.constant 0 : i32
    %c0_i32_0 = arith.constant 0 : i32
    %c0_i32_1 = arith.constant 0 : i32
    return %c0_i32, %c0_i32_0 : i32, i32
  }
  func.func @transform_2(%arg0: i32, %arg1: i32) -> (i32, i32) {
    %c0_i32 = arith.constant 0 : i32
    %c0_i32_0 = arith.constant 0 : i32
    %c0_i32_1 = arith.constant 0 : i32
    return %c0_i32, %c0_i32_0 : i32, i32
  }
  func.func @transform_3(%arg0: i32, %arg1: i32) -> (i32, i32, i32) {
    %c0_i32 = arith.constant 0 : i32
    %c0_i32_0 = arith.constant 0 : i32
    return %arg0, %c0_i32, %arg1 : i32, i32, i32
  }
}

</mosaic_0001>

<llo_original>
// kernel: conv2d_forward.3
$region0: #{conv2d_forward.3}
  #allocation0 [shape = 'u32[]', space=smem, size = 0x4, offset = 0x4, fixed_abs, tag = 'smem constant byte address 0x4 - core index']
  #allocation1 [shape = 'u32[72,128]{1,0:T(1,128)}', space=vmem, size = 0x9000, scoped, tag = 'internal scratch']
  %s0 = inlined_call_operand.vmem [shape: f32[2,8,256], index: 0, kind: input, shape index: {}, may-alias: {0,3}]
  %s1 = inlined_call_operand.vmem [shape: f32[8,1], index: 1, kind: input, shape index: {}]
  %s2 = inlined_call_operand.vmem [shape: f32[8,1], index: 2, kind: input, shape index: {}]
  %s3 = inlined_call_operand.vmem [shape: f32[2,8,256], index: 3, kind: output, shape index: {}, may-alias: {0,3}]
  %s4 = sld [smem:[#allocation0]]
  $region45: #{conv2d_forward.3} parent=0
    _
  %s6 = ssub.s32 1, %s4
  %s7 = scalar_select 0, %s6, %s4
  loop: start=0, step=1, limit=4
  $region2: #{conv2d_forward.3} parent=0 // loop_pre_header
    _
  $region3: #{conv2d_forward.3} parent=0 // loop_header
    %s9 = sphi 0, %s13
    %p10 = scmp.ge.s32.totalorder %s9, 4
    %s16 = sphi 0, %s28
    %s17 = sphi 0, %s24
    %s18 = sphi 0, %s16
    %s19 = sphi 0, %s17
    %s20 = sphi 0, %s18
    %s21 = sphi 0, %s19
    %s33 = sphi 0, %s35
    %s36 = sphi 0, %s33
    %s37 = sphi 0, %s36
    %s53 = sphi 0, %s37
    %s57 = sphi 0, %s57
    %s59 = sphi 0, %s57
    %s60 = sphi 0, %s59
    %s74 = sphi 0, %s60
    %s78 = sphi 0, %s78
    %s80 = sphi 0, %s78
    %s81 = sphi 0, %s80
    %s95 = sphi 0, %s81
    %s103 = sphi 0, %s105
    %s106 = sphi 0, %s103
    %s107 = sphi 0, %s106
    %s123 = sphi 0, %s107
  $region4: #{conv2d_forward.3} parent=0 // loop_header_branch
    %12 = sbr.rel (%p10) target = $region8
  $region5: #{conv2d_forward.3} parent=0 // loop_body
    %s14 = ssub.s32 %s9, 1
    %s15 = ssub.s32 %s9, 2
    %s22 = sadd.s32 1, %s17
    %p23 = scmp.ge.s32.totalorder %s22, 1
    %s24 = scalar_select %p23, 0, %s22
    %s25 = sadd.s32 1, %s16
    %s26 = scalar_select %p23, %s25, %s16
    %p27 = scmp.ge.s32.totalorder %s26, 2
    %s28 = scalar_select %p27, 0, %s26
    %s29 = ssub.s32 %s16, %s28
    %s30 = ssub.s32 %s17, %s24
    %s31 = sor.u32 %s29, %s30
    %p32 = scmp.eq.s32.totalorder %s31, 0
    %s34 = sadd.s32 %s33, 1
    %s35 = scalar_select %p32, %s33, %s34
    %p38 = pneg %p32
    %p39 = scmp.eq.s32.totalorder %s9, 1
    %p40 = por %p38, %p39
    %p41 = scmp.ne.s32.totalorder %s33, %s36
    %p42 = scmp.eq.s32.totalorder %s9, 0
    %p43 = por %p41, %p42
    %p44 = scmp.ne.s32.totalorder %s33, %s36
    %p45 = scmp.eq.s32.totalorder %s14, 1
    %p46 = por %p44, %p45
    %p47 = scmp.ne.s32.totalorder %s36, %s37
    %p48 = scmp.eq.s32.totalorder %s14, 0
    %p49 = por %p47, %p48
    %p50 = scmp.ne.s32.totalorder %s36, %s37
    %p51 = scmp.eq.s32.totalorder %s15, 1
    %p52 = por %p50, %p51
    %p54 = scmp.ne.s32.totalorder %s37, %s53
    %p55 = scmp.eq.s32.totalorder %s15, 0
    %p56 = por %p54, %p55
    %s58 = sadd.s32 %s57, 1
    %p61 = scmp.eq.s32.totalorder %s9, 1
    %p62 = scmp.ne.s32.totalorder %s57, %s59
    %p63 = scmp.eq.s32.totalorder %s9, 0
    %p64 = por %p62, %p63
    %p65 = scmp.ne.s32.totalorder %s57, %s59
    %p66 = scmp.eq.s32.totalorder %s14, 1
    %p67 = por %p65, %p66
    %p68 = scmp.ne.s32.totalorder %s59, %s60
    %p69 = scmp.eq.s32.totalorder %s14, 0
    %p70 = por %p68, %p69
    %p71 = scmp.ne.s32.totalorder %s59, %s60
    %p72 = scmp.eq.s32.totalorder %s15, 1
    %p73 = por %p71, %p72
    %p75 = scmp.ne.s32.totalorder %s60, %s74
    %p76 = scmp.eq.s32.totalorder %s15, 0
    %p77 = por %p75, %p76
    %s79 = sadd.s32 %s78, 1
    %p82 = scmp.eq.s32.totalorder %s9, 1
    %p83 = scmp.ne.s32.totalorder %s78, %s80
    %p84 = scmp.eq.s32.totalorder %s9, 0
    %p85 = por %p83, %p84
    %p86 = scmp.ne.s32.totalorder %s78, %s80
    %p87 = scmp.eq.s32.totalorder %s14, 1
    %p88 = por %p86, %p87
    %p89 = scmp.ne.s32.totalorder %s80, %s81
    %p90 = scmp.eq.s32.totalorder %s14, 0
    %p91 = por %p89, %p90
    %p92 = scmp.ne.s32.totalorder %s80, %s81
    %p93 = scmp.eq.s32.totalorder %s15, 1
    %p94 = por %p92, %p93
    %p96 = scmp.ne.s32.totalorder %s81, %s95
    %p97 = scmp.eq.s32.totalorder %s15, 0
    %p98 = por %p96, %p97
    %s99 = ssub.s32 %s16, %s28
    %s100 = ssub.s32 %s17, %s24
    %s101 = sor.u32 %s99, %s100
    %p102 = scmp.eq.s32.totalorder %s101, 0
    %s104 = sadd.s32 %s103, 1
    %s105 = scalar_select %p102, %s103, %s104
    %p108 = pneg %p102
    %p109 = scmp.eq.s32.totalorder %s9, 1
    %p110 = por %p108, %p109
    %p111 = scmp.ne.s32.totalorder %s103, %s106
    %p112 = scmp.eq.s32.totalorder %s9, 0
    %p113 = por %p111, %p112
    %p114 = scmp.ne.s32.totalorder %s103, %s106
    %p115 = scmp.eq.s32.totalorder %s14, 1
    %p116 = por %p114, %p115
    %p117 = scmp.ne.s32.totalorder %s106, %s107
    %p118 = scmp.eq.s32.totalorder %s14, 0
    %p119 = por %p117, %p118
    %p120 = scmp.ne.s32.totalorder %s106, %s107
    %p121 = scmp.eq.s32.totalorder %s15, 1
    %p122 = por %p120, %p121
    %p124 = scmp.ne.s32.totalorder %s107, %s123
    %p125 = scmp.eq.s32.totalorder %s15, 0
    %p126 = por %p124, %p125
    %p127 = scmp.le.s32.totalorder 1, %s9
    %p128 = scmp.lt.s32.totalorder %s9, 3
    %p129 = pnand %p127, %p128
    %p130 = pneg %p129
    // Predicated region
    $region9: #{conv2d_forward.3} parent=5 // pred_check
      _
    $region10: #{conv2d_forward.3} parent=5 // pred_check_branch
      %132 = sbr.rel (%p129) target = $region12
    $region11: #{conv2d_forward.3} parent=5 // pred_region
      %s133 = ssub.s32 %s9, 1
      // Predicated region
      $region13: #{conv2d_forward.3} parent=11 // pred_check
        %p134 = pneg %p70
      $region14: #{conv2d_forward.3} parent=11 // pred_check_branch
        %136 = sbr.rel (%p134) target = $region16
      $region15: #{conv2d_forward.3} parent=11 // pred_region
        _
      $region16: #{conv2d_forward.3} parent=11 // pred_fallthru
        _
      // Predicated region
      $region17: #{conv2d_forward.3} parent=11 // pred_check
        %p137 = pneg %p91
      $region18: #{conv2d_forward.3} parent=11 // pred_check_branch
        %139 = sbr.rel (%p137) target = $region20
      $region19: #{conv2d_forward.3} parent=11 // pred_region
        _
      $region20: #{conv2d_forward.3} parent=11 // pred_fallthru
        _
    $region12: #{conv2d_forward.3} parent=5 // pred_fallthru
      _
    %p140 = scmp.lt.s32.totalorder %s9, 2
    // Predicated region
    $region21: #{conv2d_forward.3} parent=5 // pred_check
      %p141 = pneg %p140
    $region22: #{conv2d_forward.3} parent=5 // pred_check_branch
      %143 = sbr.rel (%p141) target = $region24
    $region23: #{conv2d_forward.3} parent=5 // pred_region
      // Predicated region
      $region25: #{conv2d_forward.3} parent=23 // pred_check
        %p144 = pneg %p43
      $region26: #{conv2d_forward.3} parent=23 // pred_check_branch
        %146 = sbr.rel (%p144) target = $region28
      $region27: #{conv2d_forward.3} parent=23 // pred_region
        %s147 = smul.u32 2, %s17
        %p148 = scmp.lt.s32.totalorder %s16, 1
        %s149 = scalar_select %p148, %s16, 1
        %p150 = scmp.lt.s32.totalorder %s147, 1
        %s151 = scalar_select %p150, %s147, 1
        %s152 = smul.addr %s149, 2
        %s153 = sadd.s32 %s151, %s152
        %s154 = smul.addr %s153, 8
        %s155 = scalar_lea.vmem %s0, %s154
        %s156 = smul.u32 2, %s17
      $region28: #{conv2d_forward.3} parent=23 // pred_fallthru
        _
    $region24: #{conv2d_forward.3} parent=5 // pred_fallthru
      _
    %p157 = scmp.le.s32.totalorder 1, %s9
    %p158 = scmp.lt.s32.totalorder %s9, 3
    %p159 = pnand %p157, %p158
    %p160 = pneg %p159
    // Predicated region
    $region29: #{conv2d_forward.3} parent=5 // pred_check
      _
    $region30: #{conv2d_forward.3} parent=5 // pred_check_branch
      %162 = sbr.rel (%p159) target = $region32
    $region31: #{conv2d_forward.3} parent=5 // pred_region
      %s163 = ssub.s32 %s9, 1
      %s164 = smul.u32 2, %s19
      %p165 = scmp.lt.s32.totalorder %s18, 1
      %s166 = scalar_select %p165, %s18, 1
      %p167 = scmp.lt.s32.totalorder %s164, 1
      %s168 = scalar_select %p167, %s164, 1
      %s169 = smul.addr %s166, 2
      %s170 = sadd.s32 %s168, %s169
      %s171 = smul.addr %s170, 8
      %s172 = scalar_lea.vmem %s0, %s171
      %p173 = pneg %p49
      %p174 = pneg %p46
      %p175 = pneg %p70
      %p176 = pneg %p67
      %p177 = pneg %p91
      %p178 = pneg %p88
      %p179 = pneg %p119
      %p180 = pneg %p116
      %s181 = smul.u32 2, %s19
      %p182 = scmp.lt.s32.totalorder %s18, 1
      %s183 = scalar_select %p182, %s18, 1
      %p184 = scmp.lt.s32.totalorder %s181, 1
      %s185 = scalar_select %p184, %s181, 1
      %s186 = smul.addr %s183, 2
      %s187 = sadd.s32 %s185, %s186
      %s188 = smul.addr %s187, 8
      %s189 = scalar_lea.vmem %s3, %s188
      %s190 = smul.u32 2, %s19
      %p191 = scmp.lt.s32.totalorder %s18, 1
      %s192 = scalar_select %p191, %s18, 1
      %p193 = scmp.lt.s32.totalorder %s190, 1
      %s194 = scalar_select %p193, %s190, 1
      %s195 = smul.addr %s192, 2
      %s196 = sadd.s32 %s194, %s195
      %s197 = smul.addr %s196, 8
      %s198 = scalar_lea.vmem %s0, %s197
      %s199 = smul.u32 2, %s19
      %s200 = smul.u32 2, %s19
      %p201 = scmp.lt.s32.totalorder %s18, 1
      %s202 = scalar_select %p201, %s18, 1
      %p203 = scmp.lt.s32.totalorder %s200, 1
      %s204 = scalar_select %p203, %s200, 1
      %s205 = smul.addr %s202, 2
      %s206 = sadd.s32 %s204, %s205
      %s207 = smul.addr %s206, 8
      %s208 = scalar_lea.vmem %s3, %s207
      %s209 = smul.u32 2, %s19
      %v210 = vld [vmem:[%s198] sm:$0xff]
      %v211 = vld [vmem:[%s198 + $0x8] sm:$0xff]
      %v212 = vld [vmem:[%s1] sm:$0xff]
      %214 = vset.pattern.permute.xlu0 0
      %215 = vperm.xlu0 %214, %v212
      %v216 = vpop.permute.xlu0 %215
      %v218 = vmul.f32 %v210, %v216
      %v219 = vmul.f32 %v211, %v216
      %v220 = vld [vmem:[%s2] sm:$0xff]
      %222 = vset.pattern.permute.xlu0 0
      %223 = vperm.xlu0 %222, %v220
      %v224 = vpop.permute.xlu0 %223
      %v226 = vadd.f32 %v218, %v224
      %v227 = vadd.f32 %v219, %v224
      %vm228 = vcmp.ge.f32.partialorder %v226, 0.0
      %vm229 = vcmp.ge.f32.partialorder %v227, 0.0
      %v230 = vmul.f32 %v226, 0.1
      %v231 = vmul.f32 %v227, 0.1
      %v232 = vsel %vm228, %v226, %v230
      %v233 = vsel %vm229, %v227, %v231
      %234 = vst [vmem:[%s208] sm:$0xff] %v232
      %235 = vst [vmem:[%s208 + $0x8] sm:$0xff] %v233
      %s236 = smul.u32 2, %s19
      %p237 = scmp.lt.s32.totalorder %s18, 1
      %s238 = scalar_select %p237, %s18, 1
      %p239 = scmp.lt.s32.totalorder %s236, 1
      %s240 = scalar_select %p239, %s236, 1
      %s241 = smul.addr %s238, 2
      %s242 = sadd.s32 %s240, %s241
      %s243 = smul.addr %s242, 8
      %s244 = scalar_lea.vmem %s3, %s243
      // Predicated region
      $region33: #{conv2d_forward.3} parent=31 // pred_check
        %p245 = pneg %p116
      $region34: #{conv2d_forward.3} parent=31 // pred_check_branch
        %247 = sbr.rel (%p245) target = $region36
      $region35: #{conv2d_forward.3} parent=31 // pred_region
        %s248 = smul.u32 2, %s19
      $region36: #{conv2d_forward.3} parent=31 // pred_fallthru
        _
    $region32: #{conv2d_forward.3} parent=5 // pred_fallthru
      _
    %p249 = scmp.le.s32.totalorder 2, %s9
    // Predicated region
    $region37: #{conv2d_forward.3} parent=5 // pred_check
      %p250 = pneg %p249
    $region38: #{conv2d_forward.3} parent=5 // pred_check_branch
      %252 = sbr.rel (%p250) target = $region40
    $region39: #{conv2d_forward.3} parent=5 // pred_region
      %s253 = ssub.s32 %s9, 2
      // Predicated region
      $region41: #{conv2d_forward.3} parent=39 // pred_check
        %p254 = pneg %p122
      $region42: #{conv2d_forward.3} parent=39 // pred_check_branch
        %256 = sbr.rel (%p254) target = $region44
      $region43: #{conv2d_forward.3} parent=39 // pred_region
        %s257 = smul.u32 2, %s21
        %p258 = scmp.lt.s32.totalorder %s20, 1
        %s259 = scalar_select %p258, %s20, 1
        %p260 = scmp.lt.s32.totalorder %s257, 1
        %s261 = scalar_select %p260, %s257, 1
        %s262 = smul.addr %s259, 2
        %s263 = sadd.s32 %s261, %s262
        %s264 = smul.addr %s263, 8
        %s265 = scalar_lea.vmem %s3, %s264
      $region44: #{conv2d_forward.3} parent=39 // pred_fallthru
        _
    $region40: #{conv2d_forward.3} parent=5 // pred_fallthru
      _
  $region6: #{conv2d_forward.3} parent=0 // loop_footer
    %s13 = sadd.s32 1, %s9
  $region7: #{conv2d_forward.3} parent=0 // loop_footer_branch
    %8 = sbr.rel target = $region3
  $region8: #{conv2d_forward.3} parent=0 // loop_exit
    _

// kernel: conv2d_forward.2
$region0: #{conv2d_forward.2}
  #allocation0 [shape = 'u32[]', space=smem, size = 0x4, offset = 0x4, fixed_abs, tag = 'smem constant byte address 0x4 - core index']
  #allocation1 [shape = 'u32[72,128]{1,0:T(1,128)}', space=vmem, size = 0x9000, scoped, tag = 'internal scratch']
  %s0 = inlined_call_operand.vmem [shape: bf16[2,288,12], index: 0, kind: input, shape index: {}]
  %s1 = inlined_call_operand.vmem [shape: bf16[3,8,12], index: 1, kind: input, shape index: {}]
  %s2 = inlined_call_operand.vmem [shape: f32[2,8,256], index: 2, kind: output, shape index: {0}]
  %s3 = inlined_call_operand.vmem [shape: f32[2,8,1], index: 3, kind: output, shape index: {1}]
  %s4 = inlined_call_operand.vmem [shape: f32[2,8,1], index: 4, kind: output, shape index: {2}]
  %5 = xla_tuple %s2, %s3, %s4
  %s6 = sld [smem:[#allocation0]]
  $region57: #{conv2d_forward.2} parent=0
    _
  %s8 = ssub.s32 1, %s6
  %s9 = scalar_select 0, %s8, %s6
  loop: start=0, step=1, limit=4
  $region2: #{conv2d_forward.2} parent=0 // loop_pre_header
    _
  $region3: #{conv2d_forward.2} parent=0 // loop_header
    %s11 = sphi 0, %s15
    %p12 = scmp.ge.s32.totalorder %s11, 4
    %s18 = sphi 0, %s30
    %s19 = sphi 0, %s26
    %s20 = sphi 0, %s18
    %s21 = sphi 0, %s19
    %s22 = sphi 0, %s20
    %s23 = sphi 0, %s21
    %s33 = sphi 0, %s35
    %s36 = sphi 0, %s33
    %s37 = sphi 0, %s36
    %s53 = sphi 0, %s37
    %s57 = sphi 0, %s57
    %s59 = sphi 0, %s57
    %s60 = sphi 0, %s59
    %s74 = sphi 0, %s60
    %s82 = sphi 0, %s84
    %s85 = sphi 0, %s82
    %s86 = sphi 0, %s85
    %s102 = sphi 0, %s86
    %s110 = sphi 0, %s112
    %s113 = sphi 0, %s110
    %s114 = sphi 0, %s113
    %s130 = sphi 0, %s114
    %s138 = sphi 0, %s140
    %s141 = sphi 0, %s138
    %s142 = sphi 0, %s141
    %s158 = sphi 0, %s142
  $region4: #{conv2d_forward.2} parent=0 // loop_header_branch
    %14 = sbr.rel (%p12) target = $region8
  $region5: #{conv2d_forward.2} parent=0 // loop_body
    %s16 = ssub.s32 %s11, 1
    %s17 = ssub.s32 %s11, 2
    %s24 = sadd.s32 1, %s19
    %p25 = scmp.ge.s32.totalorder %s24, 1
    %s26 = scalar_select %p25, 0, %s24
    %s27 = sadd.s32 1, %s18
    %s28 = scalar_select %p25, %s27, %s18
    %p29 = scmp.ge.s32.totalorder %s28, 2
    %s30 = scalar_select %p29, 0, %s28
    %s31 = ssub.s32 %s18, %s30
    %p32 = scmp.eq.s32.totalorder %s31, 0
    %s34 = sadd.s32 %s33, 1
    %s35 = scalar_select %p32, %s33, %s34
    %p38 = pneg %p32
    %p39 = scmp.eq.s32.totalorder %s11, 1
    %p40 = por %p38, %p39
    %p41 = scmp.ne.s32.totalorder %s33, %s36
    %p42 = scmp.eq.s32.totalorder %s11, 0
    %p43 = por %p41, %p42
    %p44 = scmp.ne.s32.totalorder %s33, %s36
    %p45 = scmp.eq.s32.totalorder %s16, 1
    %p46 = por %p44, %p45
    %p47 = scmp.ne.s32.totalorder %s36, %s37
    %p48 = scmp.eq.s32.totalorder %s16, 0
    %p49 = por %p47, %p48
    %p50 = scmp.ne.s32.totalorder %s36, %s37
    %p51 = scmp.eq.s32.totalorder %s17, 1
    %p52 = por %p50, %p51
    %p54 = scmp.ne.s32.totalorder %s37, %s53
    %p55 = scmp.eq.s32.totalorder %s17, 0
    %p56 = por %p54, %p55
    %s58 = sadd.s32 %s57, 1
    %p61 = scmp.eq.s32.totalorder %s11, 1
    %p62 = scmp.ne.s32.totalorder %s57, %s59
    %p63 = scmp.eq.s32.totalorder %s11, 0
    %p64 = por %p62, %p63
    %p65 = scmp.ne.s32.totalorder %s57, %s59
    %p66 = scmp.eq.s32.totalorder %s16, 1
    %p67 = por %p65, %p66
    %p68 = scmp.ne.s32.totalorder %s59, %s60
    %p69 = scmp.eq.s32.totalorder %s16, 0
    %p70 = por %p68, %p69
    %p71 = scmp.ne.s32.totalorder %s59, %s60
    %p72 = scmp.eq.s32.totalorder %s17, 1
    %p73 = por %p71, %p72
    %p75 = scmp.ne.s32.totalorder %s60, %s74
    %p76 = scmp.eq.s32.totalorder %s17, 0
    %p77 = por %p75, %p76
    %s78 = ssub.s32 %s18, %s30
    %s79 = ssub.s32 %s19, %s26
    %s80 = sor.u32 %s78, %s79
    %p81 = scmp.eq.s32.totalorder %s80, 0
    %s83 = sadd.s32 %s82, 1
    %s84 = scalar_select %p81, %s82, %s83
    %p87 = pneg %p81
    %p88 = scmp.eq.s32.totalorder %s11, 1
    %p89 = por %p87, %p88
    %p90 = scmp.ne.s32.totalorder %s82, %s85
    %p91 = scmp.eq.s32.totalorder %s11, 0
    %p92 = por %p90, %p91
    %p93 = scmp.ne.s32.totalorder %s82, %s85
    %p94 = scmp.eq.s32.totalorder %s16, 1
    %p95 = por %p93, %p94
    %p96 = scmp.ne.s32.totalorder %s85, %s86
    %p97 = scmp.eq.s32.totalorder %s16, 0
    %p98 = por %p96, %p97
    %p99 = scmp.ne.s32.totalorder %s85, %s86
    %p100 = scmp.eq.s32.totalorder %s17, 1
    %p101 = por %p99, %p100
    %p103 = scmp.ne.s32.totalorder %s86, %s102
    %p104 = scmp.eq.s32.totalorder %s17, 0
    %p105 = por %p103, %p104
    %s106 = sadd.s32 %s18, %s19
    %s107 = sadd.s32 %s30, %s26
    %s108 = ssub.s32 %s106, %s107
    %p109 = scmp.eq.s32.totalorder %s108, 0
    %s111 = sadd.s32 %s110, 1
    %s112 = scalar_select %p109, %s110, %s111
    %p115 = pneg %p109
    %p116 = scmp.eq.s32.totalorder %s11, 1
    %p117 = por %p115, %p116
    %p118 = scmp.ne.s32.totalorder %s110, %s113
    %p119 = scmp.eq.s32.totalorder %s11, 0
    %p120 = por %p118, %p119
    %p121 = scmp.ne.s32.totalorder %s110, %s113
    %p122 = scmp.eq.s32.totalorder %s16, 1
    %p123 = por %p121, %p122
    %p124 = scmp.ne.s32.totalorder %s113, %s114
    %p125 = scmp.eq.s32.totalorder %s16, 0
    %p126 = por %p124, %p125
    %p127 = scmp.ne.s32.totalorder %s113, %s114
    %p128 = scmp.eq.s32.totalorder %s17, 1
    %p129 = por %p127, %p128
    %p131 = scmp.ne.s32.totalorder %s114, %s130
    %p132 = scmp.eq.s32.totalorder %s17, 0
    %p133 = por %p131, %p132
    %s134 = sadd.s32 %s18, %s19
    %s135 = sadd.s32 %s30, %s26
    %s136 = ssub.s32 %s134, %s135
    %p137 = scmp.eq.s32.totalorder %s136, 0
    %s139 = sadd.s32 %s138, 1
    %s140 = scalar_select %p137, %s138, %s139
    %p143 = pneg %p137
    %p144 = scmp.eq.s32.totalorder %s11, 1
    %p145 = por %p143, %p144
    %p146 = scmp.ne.s32.totalorder %s138, %s141
    %p147 = scmp.eq.s32.totalorder %s11, 0
    %p148 = por %p146, %p147
    %p149 = scmp.ne.s32.totalorder %s138, %s141
    %p150 = scmp.eq.s32.totalorder %s16, 1
    %p151 = por %p149, %p150
    %p152 = scmp.ne.s32.totalorder %s141, %s142
    %p153 = scmp.eq.s32.totalorder %s16, 0
    %p154 = por %p152, %p153
    %p155 = scmp.ne.s32.totalorder %s141, %s142
    %p156 = scmp.eq.s32.totalorder %s17, 1
    %p157 = por %p155, %p156
    %p159 = scmp.ne.s32.totalorder %s142, %s158
    %p160 = scmp.eq.s32.totalorder %s17, 0
    %p161 = por %p159, %p160
    %p162 = scmp.le.s32.totalorder 1, %s11
    %p163 = scmp.lt.s32.totalorder %s11, 3
    %p164 = pnand %p162, %p163
    %p165 = pneg %p164
    // Predicated region
    $region9: #{conv2d_forward.2} parent=5 // pred_check
      _
    $region10: #{conv2d_forward.2} parent=5 // pred_check_branch
      %167 = sbr.rel (%p164) target = $region12
    $region11: #{conv2d_forward.2} parent=5 // pred_region
      %s168 = ssub.s32 %s11, 1
      // Predicated region
      $region13: #{conv2d_forward.2} parent=11 // pred_check
        %p169 = pneg %p70
      $region14: #{conv2d_forward.2} parent=11 // pred_check_branch
        %171 = sbr.rel (%p169) target = $region16
      $region15: #{conv2d_forward.2} parent=11 // pred_region
        _
      $region16: #{conv2d_forward.2} parent=11 // pred_fallthru
        _
    $region12: #{conv2d_forward.2} parent=5 // pred_fallthru
      _
    %p172 = scmp.lt.s32.totalorder %s11, 2
    // Predicated region
    $region17: #{conv2d_forward.2} parent=5 // pred_check
      %p173 = pneg %p172
    $region18: #{conv2d_forward.2} parent=5 // pred_check_branch
      %175 = sbr.rel (%p173) target = $region20
    $region19: #{conv2d_forward.2} parent=5 // pred_region
      // Predicated region
      $region21: #{conv2d_forward.2} parent=19 // pred_check
        %p176 = pneg %p43
      $region22: #{conv2d_forward.2} parent=19 // pred_check_branch
        %178 = sbr.rel (%p176) target = $region24
      $region23: #{conv2d_forward.2} parent=19 // pred_region
        %p179 = scmp.lt.s32.totalorder %s18, 1
        %s180 = scalar_select %p179, %s18, 1
        %s181 = smul.addr %s180, 36
        %s182 = smul.addr %s181, 4
        %s183 = scalar_lea.vmem %s0, %s182
      $region24: #{conv2d_forward.2} parent=19 // pred_fallthru
        _
    $region20: #{conv2d_forward.2} parent=5 // pred_fallthru
      _
    %p184 = scmp.le.s32.totalorder 1, %s11
    %p185 = scmp.lt.s32.totalorder %s11, 3
    %p186 = pnand %p184, %p185
    %p187 = pneg %p186
    // Predicated region
    $region25: #{conv2d_forward.2} parent=5 // pred_check
      _
    $region26: #{conv2d_forward.2} parent=5 // pred_check_branch
      %189 = sbr.rel (%p186) target = $region28
    $region27: #{conv2d_forward.2} parent=5 // pred_region
      %s190 = ssub.s32 %s11, 1
      %p191 = scmp.lt.s32.totalorder %s20, 1
      %s192 = scalar_select %p191, %s20, 1
      %s193 = smul.addr %s192, 36
      %s194 = smul.addr %s193, 4
      %s195 = scalar_lea.vmem %s0, %s194
      %p196 = pneg %p49
      %p197 = pneg %p46
      %p198 = pneg %p70
      %p199 = pneg %p67
      %p200 = pneg %p98
      %p201 = pneg %p95
      %s202 = smul.u32 2, %s21
      %p203 = scmp.lt.s32.totalorder %s20, 1
      %s204 = scalar_select %p203, %s20, 1
      %p205 = scmp.lt.s32.totalorder %s202, 1
      %s206 = scalar_select %p205, %s202, 1
      %s207 = smul.addr %s204, 2
      %s208 = sadd.s32 %s206, %s207
      %s209 = smul.addr %s208, 8
      %s210 = scalar_lea.vmem %s2, %s209
      %p211 = pneg %p126
      %p212 = pneg %p123
      %s213 = sadd.s32 %s20, %s21
      %p214 = scmp.lt.s32.totalorder %s213, 1
      %s215 = scalar_select %p214, %s213, 1
      %s216 = smul.addr %s215, 8
      %s217 = scalar_lea.vmem %s3, %s216
      %p218 = pneg %p154
      %p219 = pneg %p151
      %s220 = sadd.s32 %s20, %s21
      %p221 = scmp.lt.s32.totalorder %s220, 1
      %s222 = scalar_select %p221, %s220, 1
      %s223 = smul.addr %s222, 8
      %s224 = scalar_lea.vmem %s4, %s223
      %p225 = scmp.lt.s32.totalorder %s20, 1
      %s226 = scalar_select %p225, %s20, 1
      %s227 = smul.addr %s226, 36
      %s228 = smul.addr %s227, 4
      %s229 = scalar_lea.vmem %s0, %s228
      %s230 = smul.u32 2, %s21
      %p231 = scmp.lt.s32.totalorder %s20, 1
      %s232 = scalar_select %p231, %s20, 1
      %p233 = scmp.lt.s32.totalorder %s230, 1
      %s234 = scalar_select %p233, %s230, 1
      %s235 = smul.addr %s232, 2
      %s236 = sadd.s32 %s234, %s235
      %s237 = smul.addr %s236, 8
      %s238 = scalar_lea.vmem %s2, %s237
      %s239 = smul.u32 2, %s21
      %s240 = sadd.s32 %s20, %s21
      %p241 = scmp.lt.s32.totalorder %s240, 1
      %s242 = scalar_select %p241, %s240, 1
      %s243 = smul.addr %s242, 8
      %s244 = scalar_lea.vmem %s3, %s243
      %s245 = sadd.s32 %s20, %s21
      %s246 = sadd.s32 %s20, %s21
      %p247 = scmp.lt.s32.totalorder %s246, 1
      %s248 = scalar_select %p247, %s246, 1
      %s249 = smul.addr %s248, 8
      %s250 = scalar_lea.vmem %s4, %s249
      %s251 = sadd.s32 %s20, %s21
      %s252 = smul.u32 %s21, 256
      %s253 = sshra.s32 %s252, 3
      %s254 = sand.u32 %s252, 7
      %s255 = smul.addr %s253, 4
      %s256 = scalar_lea.vmem %s229, %s255
      %v257 = vld [vmem:[%s256] sm:$0xf]
      %v258 = vld [vmem:[%s256 + $0x4] sm:$0xf]
      %v259 = vld [vmem:[%s256 + $0x8] sm:$0xf]
      %v260 = vld [vmem:[%s256 + $0xc] sm:$0xf]
      %v261 = vld [vmem:[%s256 + $0x10] sm:$0xf]
      %v262 = vld [vmem:[%s256 + $0x14] sm:$0xf]
      %v263 = vld [vmem:[%s256 + $0x18] sm:$0xf]
      %v264 = vld [vmem:[%s256 + $0x1c] sm:$0xf]
      %v265 = vld [vmem:[%s256 + $0x20] sm:$0xf]
      %v266 = vld [vmem:[%s256 + $0x24] sm:$0xf]
      %v267 = vld [vmem:[%s256 + $0x28] sm:$0xf]
      %v268 = vld [vmem:[%s256 + $0x2c] sm:$0xf]
      %v269 = vld [vmem:[%s256 + $0x30] sm:$0xf]
      %v270 = vld [vmem:[%s256 + $0x34] sm:$0xf]
      %v271 = vld [vmem:[%s256 + $0x38] sm:$0xf]
      %v272 = vld [vmem:[%s256 + $0x3c] sm:$0xf]
      %v273 = vld [vmem:[%s256 + $0x40] sm:$0xf]
      %v274 = vld [vmem:[%s256 + $0x44] sm:$0xf]
      %v275 = vld [vmem:[%s256 + $0x48] sm:$0xf]
      %v276 = vld [vmem:[%s256 + $0x4c] sm:$0xf]
      %v277 = vld [vmem:[%s256 + $0x50] sm:$0xf]
      %v278 = vld [vmem:[%s256 + $0x54] sm:$0xf]
      %v279 = vld [vmem:[%s256 + $0x58] sm:$0xf]
      %v280 = vld [vmem:[%s256 + $0x5c] sm:$0xf]
      %v281 = vld [vmem:[%s256 + $0x60] sm:$0xf]
      %v282 = vld [vmem:[%s256 + $0x64] sm:$0xf]
      %v283 = vld [vmem:[%s256 + $0x68] sm:$0xf]
      %v284 = vld [vmem:[%s256 + $0x6c] sm:$0xf]
      %v285 = vld [vmem:[%s256 + $0x70] sm:$0xf]
      %v286 = vld [vmem:[%s256 + $0x74] sm:$0xf]
      %v287 = vld [vmem:[%s256 + $0x78] sm:$0xf]
      %v288 = vld [vmem:[%s256 + $0x7c] sm:$0xf]
      %v289 = vld [vmem:[%s1] sm:$0xf]
      %s290 = sadd.s32 %s252, 16
      %s291 = sshra.s32 %s290, 3
      %s292 = sand.u32 %s290, 7
      %s293 = smul.addr %s291, 4
      %s294 = scalar_lea.vmem %s229, %s293
      %v295 = vld [vmem:[%s294] sm:$0xf]
      %v296 = vld [vmem:[%s294 + $0x4] sm:$0xf]
      %v297 = vld [vmem:[%s294 + $0x8] sm:$0xf]
      %v298 = vld [vmem:[%s294 + $0xc] sm:$0xf]
      %v299 = vld [vmem:[%s294 + $0x10] sm:$0xf]
      %v300 = vld [vmem:[%s294 + $0x14] sm:$0xf]
      %v301 = vld [vmem:[%s294 + $0x18] sm:$0xf]
      %v302 = vld [vmem:[%s294 + $0x1c] sm:$0xf]
      %v303 = vld [vmem:[%s294 + $0x20] sm:$0xf]
      %v304 = vld [vmem:[%s294 + $0x24] sm:$0xf]
      %v305 = vld [vmem:[%s294 + $0x28] sm:$0xf]
      %v306 = vld [vmem:[%s294 + $0x2c] sm:$0xf]
      %v307 = vld [vmem:[%s294 + $0x30] sm:$0xf]
      %v308 = vld [vmem:[%s294 + $0x34] sm:$0xf]
      %v309 = vld [vmem:[%s294 + $0x38] sm:$0xf]
      %v310 = vld [vmem:[%s294 + $0x3c] sm:$0xf]
      %v311 = vld [vmem:[%s294 + $0x40] sm:$0xf]
      %v312 = vld [vmem:[%s294 + $0x44] sm:$0xf]
      %v313 = vld [vmem:[%s294 + $0x48] sm:$0xf]
      %v314 = vld [vmem:[%s294 + $0x4c] sm:$0xf]
      %v315 = vld [vmem:[%s294 + $0x50] sm:$0xf]
      %v316 = vld [vmem:[%s294 + $0x54] sm:$0xf]
      %v317 = vld [vmem:[%s294 + $0x58] sm:$0xf]
      %v318 = vld [vmem:[%s294 + $0x5c] sm:$0xf]
      %v319 = vld [vmem:[%s294 + $0x60] sm:$0xf]
      %v320 = vld [vmem:[%s294 + $0x64] sm:$0xf]
      %v321 = vld [vmem:[%s294 + $0x68] sm:$0xf]
      %v322 = vld [vmem:[%s294 + $0x6c] sm:$0xf]
      %v323 = vld [vmem:[%s294 + $0x70] sm:$0xf]
      %v324 = vld [vmem:[%s294 + $0x74] sm:$0xf]
      %v325 = vld [vmem:[%s294 + $0x78] sm:$0xf]
      %v326 = vld [vmem:[%s294 + $0x7c] sm:$0xf]
      %s327 = scalar_lea.vmem %s1, 4
      %v328 = vld [vmem:[%s327] sm:$0xf]
      %v361 = vunpack.c.l.b16 %v295
      %v362 = vunpack.c.l.b16 %v296
      %v363 = vunpack.c.l.b16 %v297
      %v364 = vunpack.c.l.b16 %v298
      %v365 = vunpack.c.l.b16 %v299
      %v366 = vunpack.c.l.b16 %v300
      %v367 = vunpack.c.l.b16 %v301
      %v368 = vunpack.c.l.b16 %v302
      %v369 = vunpack.c.l.b16 %v303
      %v370 = vunpack.c.l.b16 %v304
      %v371 = vunpack.c.l.b16 %v305
      %v372 = vunpack.c.l.b16 %v306
      %v373 = vunpack.c.l.b16 %v307
      %v374 = vunpack.c.l.b16 %v308
      %v375 = vunpack.c.l.b16 %v309
      %v376 = vunpack.c.l.b16 %v310
      %v377 = vunpack.c.l.b16 %v311
      %v378 = vunpack.c.l.b16 %v312
      %v379 = vunpack.c.l.b16 %v313
      %v380 = vunpack.c.l.b16 %v314
      %v381 = vunpack.c.l.b16 %v315
      %v382 = vunpack.c.l.b16 %v316
      %v383 = vunpack.c.l.b16 %v317
      %v384 = vunpack.c.l.b16 %v318
      %v385 = vunpack.c.l.b16 %v319
      %v386 = vunpack.c.l.b16 %v320
      %v387 = vunpack.c.l.b16 %v321
      %v388 = vunpack.c.l.b16 %v322
      %v389 = vunpack.c.l.b16 %v323
      %v390 = vunpack.c.l.b16 %v324
      %v391 = vunpack.c.l.b16 %v325
      %v392 = vunpack.c.l.b16 %v326
      %v393 = vpack.c.b16 %v362, %v361
      %v394 = vpack.c.b16 %v364, %v363
      %v395 = vpack.c.b16 %v366, %v365
      %v396 = vpack.c.b16 %v368, %v367
      %v397 = vpack.c.b16 %v370, %v369
      %v398 = vpack.c.b16 %v372, %v371
      %v399 = vpack.c.b16 %v374, %v373
      %v400 = vpack.c.b16 %v376, %v375
      %v401 = vpack.c.b16 %v378, %v377
      %v402 = vpack.c.b16 %v380, %v379
      %v403 = vpack.c.b16 %v382, %v381
      %v404 = vpack.c.b16 %v384, %v383
      %v405 = vpack.c.b16 %v386, %v385
      %v406 = vpack.c.b16 %v388, %v387
      %v407 = vpack.c.b16 %v390, %v389
      %v408 = vpack.c.b16 %v392, %v391
      %vm409 = vcmask 97280
      %v411 = vsel %vm409, %v328, 0
      %v414 = vsel %vm409, %v393, 0
      %v417 = vsel %vm409, %v394, 0
      %v420 = vsel %vm409, %v395, 0
      %v423 = vsel %vm409, %v396, 0
      %v426 = vsel %vm409, %v397, 0
      %v429 = vsel %vm409, %v398, 0
      %v432 = vsel %vm409, %v399, 0
      %v435 = vsel %vm409, %v400, 0
      %v438 = vsel %vm409, %v401, 0
      %v441 = vsel %vm409, %v402, 0
      %v444 = vsel %vm409, %v403, 0
      %v447 = vsel %vm409, %v404, 0
      %v450 = vsel %vm409, %v405, 0
      %v453 = vsel %vm409, %v406, 0
      %v456 = vsel %vm409, %v407, 0
      %v459 = vsel %vm409, %v408, 0
      %461 = vmatpush.bf16.xpose.msra.mxu0 %v435
      %462 = vmatpush.bf16.xpose.msra.mxu0 %v432
      %463 = vmatpush.bf16.xpose.msra.mxu0 %v429
      %464 = vmatpush.bf16.xpose.msra.mxu0 %v426
      %465 = vmatpush.bf16.xpose.msra.mxu0 %v423
      %466 = vmatpush.bf16.xpose.msra.mxu0 %v420
      %467 = vmatpush.bf16.xpose.msra.mxu0 %v417
      %468 = vmatpush.bf16.xpose.msra.mxu0 %v414
      %469 = vmatmul.bf16.gmra.mxu0 %v411
      %v470 = vpop.f32.mrf.mxu0
      %v471 = vadd.f32 0.0, %v470
      %v472 = vpop.f32.mrf.mxu0
      %473 = vdwg.mxu0
      %474 = vmatpush.bf16.xpose.msra.mxu0 %v459
      %475 = vmatpush.bf16.xpose.msra.mxu0 %v456
      %476 = vmatpush.bf16.xpose.msra.mxu0 %v453
      %477 = vmatpush.bf16.xpose.msra.mxu0 %v450
      %478 = vmatpush.bf16.xpose.msra.mxu0 %v447
      %479 = vmatpush.bf16.xpose.msra.mxu0 %v444
      %480 = vmatpush.bf16.xpose.msra.mxu0 %v441
      %481 = vmatpush.bf16.xpose.msra.mxu0 %v438
      %482 = vmatmul.bf16.gmra.mxu0 %v411
      %v483 = vpop.f32.mrf.mxu0
      %v484 = vadd.f32 0.0, %v483
      %v485 = vpop.f32.mrf.mxu0
      %486 = vdwg.mxu0
      %v519 = vunpack.c.l.b16 %v257
      %v520 = vunpack.c.l.b16 %v258
      %v521 = vunpack.c.l.b16 %v259
      %v522 = vunpack.c.l.b16 %v260
      %v523 = vunpack.c.l.b16 %v261
      %v524 = vunpack.c.l.b16 %v262
      %v525 = vunpack.c.l.b16 %v263
      %v526 = vunpack.c.l.b16 %v264
      %v527 = vunpack.c.l.b16 %v265
      %v528 = vunpack.c.l.b16 %v266
      %v529 = vunpack.c.l.b16 %v267
      %v530 = vunpack.c.l.b16 %v268
      %v531 = vunpack.c.l.b16 %v269
      %v532 = vunpack.c.l.b16 %v270
      %v533 = vunpack.c.l.b16 %v271
      %v534 = vunpack.c.l.b16 %v272
      %v535 = vunpack.c.l.b16 %v273
      %v536 = vunpack.c.l.b16 %v274
      %v537 = vunpack.c.l.b16 %v275
      %v538 = vunpack.c.l.b16 %v276
      %v539 = vunpack.c.l.b16 %v277
      %v540 = vunpack.c.l.b16 %v278
      %v541 = vunpack.c.l.b16 %v279
      %v542 = vunpack.c.l.b16 %v280
      %v543 = vunpack.c.l.b16 %v281
      %v544 = vunpack.c.l.b16 %v282
      %v545 = vunpack.c.l.b16 %v283
      %v546 = vunpack.c.l.b16 %v284
      %v547 = vunpack.c.l.b16 %v285
      %v548 = vunpack.c.l.b16 %v286
      %v549 = vunpack.c.l.b16 %v287
      %v550 = vunpack.c.l.b16 %v288
      %v551 = vpack.c.b16 %v520, %v519
      %v552 = vpack.c.b16 %v522, %v521
      %v553 = vpack.c.b16 %v524, %v523
      %v554 = vpack.c.b16 %v526, %v525
      %v555 = vpack.c.b16 %v528, %v527
      %v556 = vpack.c.b16 %v530, %v529
      %v557 = vpack.c.b16 %v532, %v531
      %v558 = vpack.c.b16 %v534, %v533
      %v559 = vpack.c.b16 %v536, %v535
      %v560 = vpack.c.b16 %v538, %v537
      %v561 = vpack.c.b16 %v540, %v539
      %v562 = vpack.c.b16 %v542, %v541
      %v563 = vpack.c.b16 %v544, %v543
      %v564 = vpack.c.b16 %v546, %v545
      %v565 = vpack.c.b16 %v548, %v547
      %v566 = vpack.c.b16 %v550, %v549
      %v568 = vsel %vm409, %v289, 0
      %v571 = vsel %vm409, %v551, 0
      %v574 = vsel %vm409, %v552, 0
      %v577 = vsel %vm409, %v553, 0
      %v580 = vsel %vm409, %v554, 0
      %v583 = vsel %vm409, %v555, 0
      %v586 = vsel %vm409, %v556, 0
      %v589 = vsel %vm409, %v557, 0
      %v592 = vsel %vm409, %v558, 0
      %v595 = vsel %vm409, %v559, 0
      %v598 = vsel %vm409, %v560, 0
      %v601 = vsel %vm409, %v561, 0
      %v604 = vsel %vm409, %v562, 0
      %v607 = vsel %vm409, %v563, 0
      %v610 = vsel %vm409, %v564, 0
      %v613 = vsel %vm409, %v565, 0
      %v616 = vsel %vm409, %v566, 0
      %618 = vmatpush.bf16.xpose.msra.mxu0 %v592
      %619 = vmatpush.bf16.xpose.msra.mxu0 %v589
      %620 = vmatpush.bf16.xpose.msra.mxu0 %v586
      %621 = vmatpush.bf16.xpose.msra.mxu0 %v583
      %622 = vmatpush.bf16.xpose.msra.mxu0 %v580
      %623 = vmatpush.bf16.xpose.msra.mxu0 %v577
      %624 = vmatpush.bf16.xpose.msra.mxu0 %v574
      %625 = vmatpush.bf16.xpose.msra.mxu0 %v571
      %626 = vmatmul.bf16.gmra.mxu0 %v568
      %v627 = vpop.f32.mrf.mxu0
      %v628 = vadd.f32 %v471, %v627
      %v629 = vpop.f32.mrf.mxu0
      %630 = vdwg.mxu0
      %631 = vmatpush.bf16.xpose.msra.mxu0 %v616
      %632 = vmatpush.bf16.xpose.msra.mxu0 %v613
      %633 = vmatpush.bf16.xpose.msra.mxu0 %v610
      %634 = vmatpush.bf16.xpose.msra.mxu0 %v607
      %635 = vmatpush.bf16.xpose.msra.mxu0 %v604
      %636 = vmatpush.bf16.xpose.msra.mxu0 %v601
      %637 = vmatpush.bf16.xpose.msra.mxu0 %v598
      %638 = vmatpush.bf16.xpose.msra.mxu0 %v595
      %639 = vmatmul.bf16.gmra.mxu0 %v568
      %v640 = vpop.f32.mrf.mxu0
      %v641 = vadd.f32 %v484, %v640
      %v642 = vpop.f32.mrf.mxu0
      %643 = vdwg.mxu0
      %s644 = sadd.s32 %s252, 32
      %s645 = sshra.s32 %s644, 3
      %s646 = sand.u32 %s644, 7
      %s647 = smul.addr %s645, 4
      %s648 = scalar_lea.vmem %s229, %s647
      %v649 = vld [vmem:[%s648] sm:$0xf]
      %v650 = vld [vmem:[%s648 + $0x4] sm:$0xf]
      %v651 = vld [vmem:[%s648 + $0x8] sm:$0xf]
      %v652 = vld [vmem:[%s648 + $0xc] sm:$0xf]
      %v653 = vld [vmem:[%s648 + $0x10] sm:$0xf]
      %v654 = vld [vmem:[%s648 + $0x14] sm:$0xf]
      %v655 = vld [vmem:[%s648 + $0x18] sm:$0xf]
      %v656 = vld [vmem:[%s648 + $0x1c] sm:$0xf]
      %v657 = vld [vmem:[%s648 + $0x20] sm:$0xf]
      %v658 = vld [vmem:[%s648 + $0x24] sm:$0xf]
      %v659 = vld [vmem:[%s648 + $0x28] sm:$0xf]
      %v660 = vld [vmem:[%s648 + $0x2c] sm:$0xf]
      %v661 = vld [vmem:[%s648 + $0x30] sm:$0xf]
      %v662 = vld [vmem:[%s648 + $0x34] sm:$0xf]
      %v663 = vld [vmem:[%s648 + $0x38] sm:$0xf]
      %v664 = vld [vmem:[%s648 + $0x3c] sm:$0xf]
      %v665 = vld [vmem:[%s648 + $0x40] sm:$0xf]
      %v666 = vld [vmem:[%s648 + $0x44] sm:$0xf]
      %v667 = vld [vmem:[%s648 + $0x48] sm:$0xf]
      %v668 = vld [vmem:[%s648 + $0x4c] sm:$0xf]
      %v669 = vld [vmem:[%s648 + $0x50] sm:$0xf]
      %v670 = vld [vmem:[%s648 + $0x54] sm:$0xf]
      %v671 = vld [vmem:[%s648 + $0x58] sm:$0xf]
      %v672 = vld [vmem:[%s648 + $0x5c] sm:$0xf]
      %v673 = vld [vmem:[%s648 + $0x60] sm:$0xf]
      %v674 = vld [vmem:[%s648 + $0x64] sm:$0xf]
      %v675 = vld [vmem:[%s648 + $0x68] sm:$0xf]
      %v676 = vld [vmem:[%s648 + $0x6c] sm:$0xf]
      %v677 = vld [vmem:[%s648 + $0x70] sm:$0xf]
      %v678 = vld [vmem:[%s648 + $0x74] sm:$0xf]
      %v679 = vld [vmem:[%s648 + $0x78] sm:$0xf]
      %v680 = vld [vmem:[%s648 + $0x7c] sm:$0xf]
      %s681 = scalar_lea.vmem %s1, 8
      %v682 = vld [vmem:[%s681] sm:$0xf]
      %v715 = vunpack.c.l.b16 %v649
      %v716 = vunpack.c.l.b16 %v650
      %v717 = vunpack.c.l.b16 %v651
      %v718 = vunpack.c.l.b16 %v652
      %v719 = vunpack.c.l.b16 %v653
      %v720 = vunpack.c.l.b16 %v654
      %v721 = vunpack.c.l.b16 %v655
      %v722 = vunpack.c.l.b16 %v656
      %v723 = vunpack.c.l.b16 %v657
      %v724 = vunpack.c.l.b16 %v658
      %v725 = vunpack.c.l.b16 %v659
      %v726 = vunpack.c.l.b16 %v660
      %v727 = vunpack.c.l.b16 %v661
      %v728 = vunpack.c.l.b16 %v662
      %v729 = vunpack.c.l.b16 %v663
      %v730 = vunpack.c.l.b16 %v664
      %v731 = vunpack.c.l.b16 %v665
      %v732 = vunpack.c.l.b16 %v666
      %v733 = vunpack.c.l.b16 %v667
      %v734 = vunpack.c.l.b16 %v668
      %v735 = vunpack.c.l.b16 %v669
      %v736 = vunpack.c.l.b16 %v670
      %v737 = vunpack.c.l.b16 %v671
      %v738 = vunpack.c.l.b16 %v672
      %v739 = vunpack.c.l.b16 %v673
      %v740 = vunpack.c.l.b16 %v674
      %v741 = vunpack.c.l.b16 %v675
      %v742 = vunpack.c.l.b16 %v676
      %v743 = vunpack.c.l.b16 %v677
      %v744 = vunpack.c.l.b16 %v678
      %v745 = vunpack.c.l.b16 %v679
      %v746 = vunpack.c.l.b16 %v680
      %v747 = vpack.c.b16 %v716, %v715
      %v748 = vpack.c.b16 %v718, %v717
      %v749 = vpack.c.b16 %v720, %v719
      %v750 = vpack.c.b16 %v722, %v721
      %v751 = vpack.c.b16 %v724, %v723
      %v752 = vpack.c.b16 %v726, %v725
      %v753 = vpack.c.b16 %v728, %v727
      %v754 = vpack.c.b16 %v730, %v729
      %v755 = vpack.c.b16 %v732, %v731
      %v756 = vpack.c.b16 %v734, %v733
      %v757 = vpack.c.b16 %v736, %v735
      %v758 = vpack.c.b16 %v738, %v737
      %v759 = vpack.c.b16 %v740, %v739
      %v760 = vpack.c.b16 %v742, %v741
      %v761 = vpack.c.b16 %v744, %v743
      %v762 = vpack.c.b16 %v746, %v745
      %v764 = vsel %vm409, %v682, 0
      %v767 = vsel %vm409, %v747, 0
      %v770 = vsel %vm409, %v748, 0
      %v773 = vsel %vm409, %v749, 0
      %v776 = vsel %vm409, %v750, 0
      %v779 = vsel %vm409, %v751, 0
      %v782 = vsel %vm409, %v752, 0
      %v785 = vsel %vm409, %v753, 0
      %v788 = vsel %vm409, %v754, 0
      %v791 = vsel %vm409, %v755, 0
      %v794 = vsel %vm409, %v756, 0
      %v797 = vsel %vm409, %v757, 0
      %v800 = vsel %vm409, %v758, 0
      %v803 = vsel %vm409, %v759, 0
      %v806 = vsel %vm409, %v760, 0
      %v809 = vsel %vm409, %v761, 0
      %v812 = vsel %vm409, %v762, 0
      %814 = vmatpush.bf16.xpose.msra.mxu0 %v788
      %815 = vmatpush.bf16.xpose.msra.mxu0 %v785
      %816 = vmatpush.bf16.xpose.msra.mxu0 %v782
      %817 = vmatpush.bf16.xpose.msra.mxu0 %v779
      %818 = vmatpush.bf16.xpose.msra.mxu0 %v776
      %819 = vmatpush.bf16.xpose.msra.mxu0 %v773
      %820 = vmatpush.bf16.xpose.msra.mxu0 %v770
      %821 = vmatpush.bf16.xpose.msra.mxu0 %v767
      %822 = vmatmul.bf16.gmra.mxu0 %v764
      %v823 = vpop.f32.mrf.mxu0
      %v824 = vadd.f32 0.0, %v823
      %v825 = vpop.f32.mrf.mxu0
      %826 = vdwg.mxu0
      %827 = vmatpush.bf16.xpose.msra.mxu0 %v812
      %828 = vmatpush.bf16.xpose.msra.mxu0 %v809
      %829 = vmatpush.bf16.xpose.msra.mxu0 %v806
      %830 = vmatpush.bf16.xpose.msra.mxu0 %v803
      %831 = vmatpush.bf16.xpose.msra.mxu0 %v800
      %832 = vmatpush.bf16.xpose.msra.mxu0 %v797
      %833 = vmatpush.bf16.xpose.msra.mxu0 %v794
      %834 = vmatpush.bf16.xpose.msra.mxu0 %v791
      %835 = vmatmul.bf16.gmra.mxu0 %v764
      %v836 = vpop.f32.mrf.mxu0
      %v837 = vadd.f32 0.0, %v836
      %v838 = vpop.f32.mrf.mxu0
      %839 = vdwg.mxu0
      %v840 = vadd.f32 %v628, %v824
      %v841 = vadd.f32 %v641, %v837
      %842 = vst [vmem:[%s238] sm:$0xff] %v840
      %843 = vst [vmem:[%s238 + $0x8] sm:$0xff] %v841
      %v844 = vadd.f32 %v840, %v841
      %845 = vadd.xlane.f32.xlu0 %v844
      %v846 = vpop.xlane.xlu0 %845
      %vm847 = vcmask 7168
      %848 = vst.msk [vmem:[%s244] sm:$0xff] %vm847, %v846
      %v849 = vmul.f32 %v840, %v840
      %v850 = vmul.f32 %v841, %v841
      %v851 = vadd.f32 %v849, %v850
      %852 = vadd.xlane.f32.xlu0 %v851
      %v853 = vpop.xlane.xlu0 %852
      %854 = vst.msk [vmem:[%s250] sm:$0xff] %vm847, %v853
      %s855 = smul.u32 2, %s21
      %p856 = scmp.lt.s32.totalorder %s20, 1
      %s857 = scalar_select %p856, %s20, 1
      %p858 = scmp.lt.s32.totalorder %s855, 1
      %s859 = scalar_select %p858, %s855, 1
      %s860 = smul.addr %s857, 2
      %s861 = sadd.s32 %s859, %s860
      %s862 = smul.addr %s861, 8
      %s863 = scalar_lea.vmem %s2, %s862
      %s864 = sadd.s32 %s20, %s21
      %p865 = scmp.lt.s32.totalorder %s864, 1
      %s866 = scalar_select %p865, %s864, 1
      %s867 = smul.addr %s866, 8
      %s868 = scalar_lea.vmem %s3, %s867
      %s869 = sadd.s32 %s20, %s21
      %p870 = scmp.lt.s32.totalorder %s869, 1
      %s871 = scalar_select %p870, %s869, 1
      %s872 = smul.addr %s871, 8
      %s873 = scalar_lea.vmem %s4, %s872
      // Predicated region
      $region29: #{conv2d_forward.2} parent=27 // pred_check
        %p874 = pneg %p95
      $region30: #{conv2d_forward.2} parent=27 // pred_check_branch
        %876 = sbr.rel (%p874) target = $region32
      $region31: #{conv2d_forward.2} parent=27 // pred_region
        %s877 = smul.u32 2, %s21
      $region32: #{conv2d_forward.2} parent=27 // pred_fallthru
        _
      // Predicated region
      $region33: #{conv2d_forward.2} parent=27 // pred_check
        %p878 = pneg %p123
      $region34: #{conv2d_forward.2} parent=27 // pred_check_branch
        %880 = sbr.rel (%p878) target = $region36
      $region35: #{conv2d_forward.2} parent=27 // pred_region
        %s881 = sadd.s32 %s20, %s21
      $region36: #{conv2d_forward.2} parent=27 // pred_fallthru
        _
      // Predicated region
      $region37: #{conv2d_forward.2} parent=27 // pred_check
        %p882 = pneg %p151
      $region38: #{conv2d_forward.2} parent=27 // pred_check_branch
        %884 = sbr.rel (%p882) target = $region40
      $region39: #{conv2d_forward.2} parent=27 // pred_region
        %s885 = sadd.s32 %s20, %s21
      $region40: #{conv2d_forward.2} parent=27 // pred_fallthru
        _
    $region28: #{conv2d_forward.2} parent=5 // pred_fallthru
      _
    %p886 = scmp.le.s32.totalorder 2, %s11
    // Predicated region
    $region41: #{conv2d_forward.2} parent=5 // pred_check
      %p887 = pneg %p886
    $region42: #{conv2d_forward.2} parent=5 // pred_check_branch
      %889 = sbr.rel (%p887) target = $region44
    $region43: #{conv2d_forward.2} parent=5 // pred_region
      %s890 = ssub.s32 %s11, 2
      // Predicated region
      $region45: #{conv2d_forward.2} parent=43 // pred_check
        %p891 = pneg %p101
      $region46: #{conv2d_forward.2} parent=43 // pred_check_branch
        %893 = sbr.rel (%p891) target = $region48
      $region47: #{conv2d_forward.2} parent=43 // pred_region
        %s894 = smul.u32 2, %s23
        %p895 = scmp.lt.s32.totalorder %s22, 1
        %s896 = scalar_select %p895, %s22, 1
        %p897 = scmp.lt.s32.totalorder %s894, 1
        %s898 = scalar_select %p897, %s894, 1
        %s899 = smul.addr %s896, 2
        %s900 = sadd.s32 %s898, %s899
        %s901 = smul.addr %s900, 8
        %s902 = scalar_lea.vmem %s2, %s901
      $region48: #{conv2d_forward.2} parent=43 // pred_fallthru
        _
      // Predicated region
      $region49: #{conv2d_forward.2} parent=43 // pred_check
        %p903 = pneg %p129
      $region50: #{conv2d_forward.2} parent=43 // pred_check_branch
        %905 = sbr.rel (%p903) target = $region52
      $region51: #{conv2d_forward.2} parent=43 // pred_region
        %s906 = sadd.s32 %s22, %s23
        %p907 = scmp.lt.s32.totalorder %s906, 1
        %s908 = scalar_select %p907, %s906, 1
        %s909 = smul.addr %s908, 8
        %s910 = scalar_lea.vmem %s3, %s909
      $region52: #{conv2d_forward.2} parent=43 // pred_fallthru
        _
      // Predicated region
      $region53: #{conv2d_forward.2} parent=43 // pred_check
        %p911 = pneg %p157
      $region54: #{conv2d_forward.2} parent=43 // pred_check_branch
        %913 = sbr.rel (%p911) target = $region56
      $region55: #{conv2d_forward.2} parent=43 // pred_region
        %s914 = sadd.s32 %s22, %s23
        %p915 = scmp.lt.s32.totalorder %s914, 1
        %s916 = scalar_select %p915, %s914, 1
        %s917 = smul.addr %s916, 8
        %s918 = scalar_lea.vmem %s4, %s917
      $region56: #{conv2d_forward.2} parent=43 // pred_fallthru
        _
    $region44: #{conv2d_forward.2} parent=5 // pred_fallthru
      _
  $region6: #{conv2d_forward.2} parent=0 // loop_footer
    %s15 = sadd.s32 1, %s11
  $region7: #{conv2d_forward.2} parent=0 // loop_footer_branch
    %10 = sbr.rel target = $region3
  $region8: #{conv2d_forward.2} parent=0 // loop_exit
    _

</llo_original>
